<compile_context>
chip_gen: v6e
topology: v6e:2x2x1
jax: 0.10.0
libtpu: 0.0.40
codegen_flags: <defaults>
</compile_context>

<pallas_src>
import functools

import jax
import jax.numpy as jnp
from jax import lax
from jax.experimental import pallas as pl
from jax.experimental.pallas import tpu as pltpu


_VMEM_LIMIT = 48 * 1024 * 1024


# ----------------------------------------------------------------------------
# small helpers
# ----------------------------------------------------------------------------
def _round_up(n, m):
    return ((n + m - 1) // m) * m


def _row_block(n, cap=512):
    if n <= cap:
        return n
    for b in range(cap, 7, -1):
        if n % b == 0 and b % 8 == 0:
            return b
    return n


def _time_block(T, cap=32):
    b = min(T, cap)
    while T % b:
        b -= 1
    return b


# ----------------------------------------------------------------------------
# Pallas kernels
# ----------------------------------------------------------------------------
def _in_proj1_kernel(x_ref, w_ref, b_ref, o_ref):
    """Layer-0 time-parallel input projection, both directions fused along N.

    x_ref: (Mb, In) bf16   w_ref: (In, 8Hp) bf16   b_ref: (1, 8Hp) f32
    o_ref: (Mb, 8Hp) f32  (bias folded in, f32 accumulation).
    """
    o_ref[...] = (jnp.dot(x_ref[...], w_ref[...],
                          preferred_element_type=jnp.float32) + b_ref[...])


def _in_proj2_kernel(xf_ref, xb_ref, wf_ref, wb_ref, b_ref, o_ref):
    """Layer-1 projection: consumes layer-0 fwd/bwd halves separately (no concat).

    xf/xb: (Mb, Hp) bf16   wf/wb: (Hp, 8Hp) bf16   b: (1, 8Hp) f32
    o: (Mb, 8Hp) f32.
    """
    o_ref[...] = (jnp.dot(xf_ref[...], wf_ref[...],
                          preferred_element_type=jnp.float32)
                  + jnp.dot(xb_ref[...], wb_ref[...],
                            preferred_element_type=jnp.float32)
                  + b_ref[...])


def _lstm_cell(gates, c_prev, Hp):
    """PyTorch gate order (i, f, g, o); slices are lane-aligned since Hp%128==0.
    Padded lanes stay exactly zero (zero bias/weights -> h_pad = 0.5*tanh(0)=0)."""
    i_g = jax.nn.sigmoid(gates[:, 0 * Hp:1 * Hp])
    f_g = jax.nn.sigmoid(gates[:, 1 * Hp:2 * Hp])
    g_g = jnp.tanh(gates[:, 2 * Hp:3 * Hp])
    o_g = jax.nn.sigmoid(gates[:, 3 * Hp:4 * Hp])
    c = f_g * c_prev + i_g * g_g
    h = o_g * jnp.tanh(c)
    return h, c


def _bidir_rec_seq_kernel(Tb, Hp, gxf_ref, gxb_ref, whh_ref,
                          outf_ref, outb_ref, hf_s, cf_s, hb_s, cb_s):
    """Layer-0 recurrence: fwd and bwd chains interleaved inside each time block.

    grid = (nT,).  gxf is the fwd gate block at time-block tb; gxb is the bwd
    gate block at time-block nT-1-tb (traversed in reverse local order).
    Per-step hidden states are emitted as bf16 into two separate sequences.
    """
    tb = pl.program_id(0)

    @pl.when(tb == 0)
    def _():
        for s in (hf_s, cf_s, hb_s, cb_s):
            s[...] = jnp.zeros_like(s)

    whh_f = whh_ref[0]          # (Hp, 4Hp) bf16, resident (single-buffered)
    whh_b = whh_ref[1]

    def step(i, carry):
        hf, cf, hb, cb = carry
        li_b = Tb - 1 - i
        g_f = gxf_ref[i] + jnp.dot(hf.astype(whh_f.dtype), whh_f,
                                   preferred_element_type=jnp.float32)
        g_b = gxb_ref[li_b] + jnp.dot(hb.astype(whh_b.dtype), whh_b,
                                      preferred_element_type=jnp.float32)
        hf, cf = _lstm_cell(g_f, cf, Hp)
        hb, cb = _lstm_cell(g_b, cb, Hp)
        outf_ref[i] = hf.astype(outf_ref.dtype)
        outb_ref[li_b] = hb.astype(outb_ref.dtype)
        return hf, cf, hb, cb

    carry0 = (hf_s[...], cf_s[...], hb_s[...], cb_s[...])
    hf, cf, hb, cb = lax.fori_loop(0, Tb, step, carry0, unroll=True)
    hf_s[...] = hf
    cf_s[...] = cf
    hb_s[...] = hb
    cb_s[...] = cb


def _bidir_rec_fc_kernel(Tb, Hp, gxf_ref, gxb_ref, whh_ref, wfc_ref, fc_ref,
                         hf_s, cf_s, hb_s, cb_s):
    """Layer-1 recurrence + fused FC.  The per-step output sequence is unused by
    the model, so it is never written to HBM.  At the last time block the two
    final hidden states (h_fwd(T-1), h_bwd(0)) are pushed through the split FC
    weight and summed in VMEM."""
    tb = pl.program_id(0)

    @pl.when(tb == 0)
    def _():
        for s in (hf_s, cf_s, hb_s, cb_s):
            s[...] = jnp.zeros_like(s)

    whh_f = whh_ref[0]
    whh_b = whh_ref[1]

    def step(i, carry):
        hf, cf, hb, cb = carry
        li_b = Tb - 1 - i
        g_f = gxf_ref[i] + jnp.dot(hf.astype(whh_f.dtype), whh_f,
                                   preferred_element_type=jnp.float32)
        g_b = gxb_ref[li_b] + jnp.dot(hb.astype(whh_b.dtype), whh_b,
                                      preferred_element_type=jnp.float32)
        hf, cf = _lstm_cell(g_f, cf, Hp)
        hb, cb = _lstm_cell(g_b, cb, Hp)
        return hf, cf, hb, cb

    carry0 = (hf_s[...], cf_s[...], hb_s[...], cb_s[...])
    hf, cf, hb, cb = lax.fori_loop(0, Tb, step, carry0, unroll=True)
    hf_s[...] = hf
    cf_s[...] = cf
    hb_s[...] = hb
    cb_s[...] = cb

    @pl.when(tb == pl.num_programs(0) - 1)
    def _():
        fc_ref[...] = (jnp.dot(hf.astype(wfc_ref.dtype), wfc_ref[0],
                               preferred_element_type=jnp.float32)
                       + jnp.dot(hb.astype(wfc_ref.dtype), wfc_ref[1],
                                 preferred_element_type=jnp.float32))


# ----------------------------------------------------------------------------
# pallas_call wrappers
# ----------------------------------------------------------------------------
def input_projection_l0(x_flat, wih, bias):
    """x_flat: (M, In) bf16 ; wih: (In, 8Hp) bf16 ; bias: (1, 8Hp) f32
    -> gates_x (M, 8Hp) f32 (fwd gates in [:4Hp], bwd gates in [4Hp:])."""
    M, In = x_flat.shape
    G8 = wih.shape[-1]
    Mb = _row_block(M)
    nM = M // Mb
    return pl.pallas_call(
        _in_proj1_kernel,
        out_shape=jax.ShapeDtypeStruct((M, G8), jnp.float32),
        grid_spec=pltpu.PrefetchScalarGridSpec(
            num_scalar_prefetch=0,
            grid=(nM,),
            in_specs=[
                pl.BlockSpec((Mb, In), lambda m: (m, 0)),
                pl.BlockSpec((In, G8), lambda m: (0, 0),
                             pipeline_mode=pl.Buffered(1)),
                pl.BlockSpec((1, G8), lambda m: (0, 0),
                             pipeline_mode=pl.Buffered(1)),
            ],
            out_specs=pl.BlockSpec((Mb, G8), lambda m: (m, 0)),
        ),
        compiler_params=pltpu.CompilerParams(
            dimension_semantics=("parallel",),
            vmem_limit_bytes=_VMEM_LIMIT),
    )(x_flat, wih, bias)


def input_projection_l1(xf_flat, xb_flat, wih_f, wih_b, bias):
    """xf/xb: (M, Hp) bf16 layer-0 fwd/bwd sequences ; wih_f/wih_b: (Hp, 8Hp) bf16
    -> gates_x (M, 8Hp) f32 for layer 1 (no concat of the layer-0 halves)."""
    M, Hp = xf_flat.shape
    G8 = wih_f.shape[-1]
    Mb = _row_block(M)
    nM = M // Mb
    return pl.pallas_call(
        _in_proj2_kernel,
        out_shape=jax.ShapeDtypeStruct((M, G8), jnp.float32),
        grid_spec=pltpu.PrefetchScalarGridSpec(
            num_scalar_prefetch=0,
            grid=(nM,),
            in_specs=[
                pl.BlockSpec((Mb, Hp), lambda m: (m, 0)),
                pl.BlockSpec((Mb, Hp), lambda m: (m, 0)),
                pl.BlockSpec((Hp, G8), lambda m: (0, 0),
                             pipeline_mode=pl.Buffered(1)),
                pl.BlockSpec((Hp, G8), lambda m: (0, 0),
                             pipeline_mode=pl.Buffered(1)),
                pl.BlockSpec((1, G8), lambda m: (0, 0),
                             pipeline_mode=pl.Buffered(1)),
            ],
            out_specs=pl.BlockSpec((Mb, G8), lambda m: (m, 0)),
        ),
        compiler_params=pltpu.CompilerParams(
            dimension_semantics=("parallel",),
            vmem_limit_bytes=_VMEM_LIMIT),
    )(xf_flat, xb_flat, wih_f, wih_b, bias)


def bidir_lstm_seq(gx, whh, Tb):
    """gx: (T, Bp, 8Hp) f32 ; whh: (2, Hp, 4Hp) bf16
    -> (out_fwd, out_bwd), each (T, Bp, Hp) bf16."""
    T, Bp, G8 = gx.shape
    G = G8 // 2
    Hp = G // 4
    nT = T // Tb
    kernel = functools.partial(_bidir_rec_seq_kernel, Tb, Hp)
    return pl.pallas_call(
        kernel,
        out_shape=(jax.ShapeDtypeStruct((T, Bp, Hp), jnp.bfloat16),
                   jax.ShapeDtypeStruct((T, Bp, Hp), jnp.bfloat16)),
        grid_spec=pltpu.PrefetchScalarGridSpec(
            num_scalar_prefetch=0,
            grid=(nT,),
            in_specs=[
                pl.BlockSpec((Tb, Bp, G), lambda tb: (tb, 0, 0)),            # fwd gates
                pl.BlockSpec((Tb, Bp, G), lambda tb: (nT - 1 - tb, 0, 1)),    # bwd gates
                pl.BlockSpec((2, Hp, G), lambda tb: (0, 0, 0),
                             pipeline_mode=pl.Buffered(1)),
            ],
            out_specs=(
                pl.BlockSpec((Tb, Bp, Hp), lambda tb: (tb, 0, 0)),
                pl.BlockSpec((Tb, Bp, Hp), lambda tb: (nT - 1 - tb, 0, 0)),
            ),
            scratch_shapes=[pltpu.VMEM((Bp, Hp), jnp.float32)] * 4,
        ),
        compiler_params=pltpu.CompilerParams(
            dimension_semantics=("arbitrary",),
            vmem_limit_bytes=_VMEM_LIMIT),
    )(gx, gx, whh)


def bidir_lstm_final_fc(gx, whh, wfc, Tb):
    """Last LSTM layer + fused FC on the final hidden states.

    gx: (T, Bp, 8Hp) f32 ; whh: (2, Hp, 4Hp) bf16 ; wfc: (2, Hp, O) bf16
    -> (Bp, O) f32 (FC bias added outside)."""
    T, Bp, G8 = gx.shape
    G = G8 // 2
    Hp = G // 4
    O = wfc.shape[-1]
    nT = T // Tb
    kernel = functools.partial(_bidir_rec_fc_kernel, Tb, Hp)
    return pl.pallas_call(
        kernel,
        out_shape=jax.ShapeDtypeStruct((Bp, O), jnp.float32),
        grid_spec=pltpu.PrefetchScalarGridSpec(
            num_scalar_prefetch=0,
            grid=(nT,),
            in_specs=[
                pl.BlockSpec((Tb, Bp, G), lambda tb: (tb, 0, 0)),
                pl.BlockSpec((Tb, Bp, G), lambda tb: (nT - 1 - tb, 0, 1)),
                pl.BlockSpec((2, Hp, G), lambda tb: (0, 0, 0),
                             pipeline_mode=pl.Buffered(1)),
                pl.BlockSpec((2, Hp, O), lambda tb: (0, 0, 0),
                             pipeline_mode=pl.Buffered(1)),
            ],
            out_specs=pl.BlockSpec((Bp, O), lambda tb: (0, 0)),
            scratch_shapes=[pltpu.VMEM((Bp, Hp), jnp.float32)] * 4,
        ),
        compiler_params=pltpu.CompilerParams(
            dimension_semantics=("arbitrary",),
            vmem_limit_bytes=_VMEM_LIMIT),
    )(gx, gx, whh, wfc)


# ----------------------------------------------------------------------------
# Full model forward
# ----------------------------------------------------------------------------
def lstm_model_forward(text, params):
    """text: list of 5 int32 [B, T] id arrays.  Dropouts are identity (eval)."""
    # Embedding lookups (gather = glue, plain JAX); tables are bf16, row 0 is 0.
    embs = [params["emb"][k][text[k]] for k in range(5)]   # each (B, T, E) bf16
    x = jnp.concatenate(embs, axis=2)                      # (B, T, 5E) bf16
    x = jnp.transpose(x, (1, 0, 2))                        # (T, B, 5E) time-major
    T, B, In0 = x.shape
    Hp = params["l0"]["whh"].shape[1]
    Bp = _round_up(B, 8)
    if Bp != B:                                            # padded rows are inert
        x = jnp.pad(x, ((0, 0), (0, Bp - B), (0, 0)))
    Tb = _time_block(T)

    # ---- layer 0: time-parallel input projection, then serial recurrence ----
    gx0 = input_projection_l0(x.reshape(T * Bp, In0),
                              params["l0"]["wih"], params["l0"]["bias"])
    gx0 = gx0.reshape(T, Bp, 8 * Hp)
    out_f, out_b = bidir_lstm_seq(gx0, params["l0"]["whh"], Tb)   # bf16 (T,Bp,Hp)

    # ---- layer 1 (+ fused FC on final hidden states); no concat/astype glue ----
    gx1 = input_projection_l1(out_f.reshape(T * Bp, Hp),
                              out_b.reshape(T * Bp, Hp),
                              params["l1"]["wih_f"], params["l1"]["wih_b"],
                              params["l1"]["bias"])
    gx1 = gx1.reshape(T, Bp, 8 * Hp)
    fc = bidir_lstm_final_fc(gx1, params["l1"]["whh"], params["wfc"], Tb)  # (Bp,O)

    # hidden = dropout(cat(h_fwd(T-1), h_bwd(0))) -> fc ; dropout = identity
    return fc[:B] + params["fc_b"]


# ----------------------------------------------------------------------------
# Deterministic parameter construction (kernel-ready padded layout)
# ----------------------------------------------------------------------------
def init_params(key, vocab_sizes, emb_dim, hidden_dim, output_dim):
    H = hidden_dim
    Hp = _round_up(H, 128)
    keys = jax.random.split(key, 64)
    ki = iter(range(64))

    def nxt():
        return keys[next(ki)]

    emb = []
    for V in vocab_sizes:
        t = jax.random.normal(nxt(), (V, emb_dim), jnp.float32) * 0.1
        t = t.at[0].set(0.0)                         # padding_idx = 0
        emb.append(t.astype(jnp.bfloat16))           # bf16 glue end-to-end

    s = 1.0 / float(H) ** 0.5

    def lstm_dir(in_dim):
        w_ih = jax.random.uniform(nxt(), (4 * H, in_dim), jnp.float32, -s, s)
        w_hh = jax.random.uniform(nxt(), (4 * H, H), jnp.float32, -s, s)
        b_ih = jax.random.uniform(nxt(), (4 * H,), jnp.float32, -s, s)
        b_hh = jax.random.uniform(nxt(), (4 * H,), jnp.float32, -s, s)
        return w_ih, w_hh, b_ih, b_hh

    def pad_gate_cols(w_t):
        """(D, 4H) matmul-layout -> (D, 4Hp); gate k lives at cols [k*Hp, k*Hp+H)."""
        D = w_t.shape[0]
        out = jnp.zeros((D, 4 * Hp), w_t.dtype)
        for k in range(4):
            out = out.at[:, k * Hp:k * Hp + H].set(w_t[:, k * H:(k + 1) * H])
        return out

    def pad_rows(w):
        return jnp.zeros((Hp,) + w.shape[1:], w.dtype).at[:H].set(w)

    def pack_dir(w_ih, w_hh, b_ih, b_hh):
        wih = pad_gate_cols(w_ih.T)                    # (in_dim, 4Hp)
        whh = pad_rows(pad_gate_cols(w_hh.T))          # (Hp, 4Hp)
        bias = pad_gate_cols((b_ih + b_hh).reshape(1, 4 * H))   # (1, 4Hp)
        return wih, whh, bias

    # ---- layer 0 ----
    in0 = emb_dim * len(vocab_sizes)
    f0 = lstm_dir(in0)
    b0 = lstm_dir(in0)
    wih_f, whh_f, bia_f = pack_dir(*f0)
    wih_b, whh_b, bia_b = pack_dir(*b0)
    l0 = {
        "wih": jnp.concatenate([wih_f, wih_b], axis=1).astype(jnp.bfloat16),  # (In, 8Hp)
        "whh": jnp.stack([whh_f, whh_b]).astype(jnp.bfloat16),                # (2, Hp, 4Hp)
        "bias": jnp.concatenate([bia_f, bia_b], axis=1),                      # (1, 8Hp) f32
    }

    # ---- layer 1 (input at time t = [h0_fwd(t), h0_bwd(t)], width 2H) ----
    f1 = lstm_dir(2 * H)
    b1 = lstm_dir(2 * H)

    def pack_dir_l1(w_ih, w_hh, b_ih, b_hh):
        wcols = pad_gate_cols(w_ih.T)                  # (2H, 4Hp)
        w_from_f = pad_rows(wcols[:H])                 # acts on layer-0 fwd h
        w_from_b = pad_rows(wcols[H:])                 # acts on layer-0 bwd h
        whh = pad_rows(pad_gate_cols(w_hh.T))
        bias = pad_gate_cols((b_ih + b_hh).reshape(1, 4 * H))
        return w_from_f, w_from_b, whh, bias

    f1_ff, f1_fb, whh1_f, bia1_f = pack_dir_l1(*f1)
    b1_ff, b1_fb, whh1_b, bia1_b = pack_dir_l1(*b1)
    l1 = {
        "wih_f": jnp.concatenate([f1_ff, b1_ff], axis=1).astype(jnp.bfloat16),  # (Hp, 8Hp)
        "wih_b": jnp.concatenate([f1_fb, b1_fb], axis=1).astype(jnp.bfloat16),  # (Hp, 8Hp)
        "whh": jnp.stack([whh1_f, whh1_b]).astype(jnp.bfloat16),                # (2, Hp, 4Hp)
        "bias": jnp.concatenate([bia1_f, bia1_b], axis=1),                      # (1, 8Hp) f32
    }

    # ---- FC on cat(h1_fwd(T-1), h1_bwd(0)) ; split into per-direction halves ----
    fc_w = jax.random.normal(nxt(), (output_dim, 2 * H), jnp.float32) * 0.05
    fc_b = jnp.zeros((output_dim,), jnp.float32)
    wfc = jnp.stack([pad_rows(fc_w[:, :H].T),
                     pad_rows(fc_w[:, H:].T)]).astype(jnp.bfloat16)   # (2, Hp, O)

    return {"emb": emb, "l0": l0, "l1": l1, "wfc": wfc, "fc_b": fc_b}


# ----------------------------------------------------------------------------
if __name__ == "__main__":
    B, T = 2, 8
    EMB_DIM = 32          # per-field embedding dim (stand-in for the hardcoded 300)
    HIDDEN = 32
    OUT_DIM = 4
    VOCABS = [50, 40, 60, 30, 45]

    key = jax.random.PRNGKey(0)
    k_par, k_ids = jax.random.split(key)
    params = init_params(k_par, VOCABS, EMB_DIM, HIDDEN, OUT_DIM)

    id_keys = jax.random.split(k_ids, 5)
    text = [jax.random.randint(id_keys[i], (B, T), 0, VOCABS[i], dtype=jnp.int32)
            for i in range(5)]

    out = lstm_model_forward(text, params)
    out = jax.block_until_ready(out)
    assert out.shape == (B, OUT_DIM) and out.dtype == jnp.float32
    assert bool(jnp.all(jnp.isfinite(out)))
    print("KERNEL_OK")
</pallas_src>

<mosaic_0001>
module attributes {stable_mosaic.version = 11 : i64} {
  func.func @_in_proj1_kernel(%arg0: i32, %arg1: memref<64x160xbf16, #tpu.memory_space<vmem>>, %arg2: memref<160x1024xbf16, #tpu.memory_space<vmem>>, %arg3: memref<1x1024xf32, #tpu.memory_space<vmem>>, %arg4: memref<64x1024xf32, #tpu.memory_space<vmem>>) attributes {dimension_semantics = [#tpu.dimension_semantics<parallel>], iteration_bounds = array<i64: 1>, scalar_prefetch = 0 : i64, scratch_operands = 0 : i64, tpu.core_type = #tpu.core_type<tc>, window_params = [{transform_indices = @transform_0, window_bounds = array<i64: 64, 160>}, {pipeline_mode = #tpu.pipeline_mode<synchronous>, transform_indices = @transform_1, window_bounds = array<i64: 160, 1024>}, {pipeline_mode = #tpu.pipeline_mode<synchronous>, transform_indices = @transform_2, window_bounds = array<i64: 1, 1024>}, {transform_indices = @transform_3, window_bounds = array<i64: 64, 1024>}]} {
    %c0 = arith.constant 0 : index
    %c0_0 = arith.constant 0 : index
    %0 = vector.load %arg1[%c0, %c0_0] : memref<64x160xbf16, #tpu.memory_space<vmem>>, vector<64x160xbf16>
    %c0_1 = arith.constant 0 : index
    %c0_2 = arith.constant 0 : index
    %1 = vector.load %arg2[%c0_1, %c0_2] : memref<160x1024xbf16, #tpu.memory_space<vmem>>, vector<160x1024xbf16>
    %cst = arith.constant dense<0.000000e+00> : vector<64x1024xf32>
    %2 = tpu.matmul %0, %1, %cst {dimension_numbers = #tpu.dot_dimension_numbers<[1], [0], [0], [1], [0, 0, 1, 1], [], []>} : vector<64x160xbf16>, vector<160x1024xbf16>, vector<64x1024xf32> -> vector<64x1024xf32>
    %c0_3 = arith.constant 0 : index
    %c0_4 = arith.constant 0 : index
    %3 = vector.load %arg3[%c0_3, %c0_4] : memref<1x1024xf32, #tpu.memory_space<vmem>>, vector<1x1024xf32>
    %4 = vector.broadcast %3 : vector<1x1024xf32> to vector<64x1024xf32>
    %5 = arith.addf %2, %4 : vector<64x1024xf32>
    %c0_5 = arith.constant 0 : index
    %c0_6 = arith.constant 0 : index
    %6 = vector.load %arg4[%c0_5, %c0_6] : memref<64x1024xf32, #tpu.memory_space<vmem>>, vector<64x1024xf32>
    tpu.vector_store %arg4[%c0_5, %c0_6], %5 {strides = array<i32>} : memref<64x1024xf32, #tpu.memory_space<vmem>>, vector<64x1024xf32>,
    return
  }
  func.func @transform_0(%arg0: i32) -> (i32, i32) {
    %c0_i32 = arith.constant 0 : i32
    %c0_i32_0 = arith.constant 0 : i32
    return %arg0, %c0_i32 : i32, i32
  }
  func.func @transform_1(%arg0: i32) -> (i32, i32) {
    %c0_i32 = arith.constant 0 : i32
    %c0_i32_0 = arith.constant 0 : i32
    %c0_i32_1 = arith.constant 0 : i32
    return %c0_i32, %c0_i32_0 : i32, i32
  }
  func.func @transform_2(%arg0: i32) -> (i32, i32) {
    %c0_i32 = arith.constant 0 : i32
    %c0_i32_0 = arith.constant 0 : i32
    %c0_i32_1 = arith.constant 0 : i32
    return %c0_i32, %c0_i32_0 : i32, i32
  }
  func.func @transform_3(%arg0: i32) -> (i32, i32) {
    %c0_i32 = arith.constant 0 : i32
    %c0_i32_0 = arith.constant 0 : i32
    return %arg0, %c0_i32 : i32, i32
  }
}

</mosaic_0001>

<llo_original>
// kernel: tpu_custom_call.1
$region0: #{tpu_custom_call.1}
  #allocation0 [shape = 'u32[]', space=smem, size = 0x4, offset = 0x4, fixed_abs, tag = 'smem constant byte address 0x4 - core index']
  #allocation1 [shape = 'u32[144,128]{1,0:T(1,128)}', space=vmem, size = 0x12000, scoped, tag = 'internal scratch']
  %s0 = inlined_call_operand.hbm [shape: bf16[64,160], index: 0, kind: input, shape index: {}]
  %s1 = inlined_call_operand.hbm [shape: bf16[160,1024], index: 1, kind: input, shape index: {}]
  %s2 = inlined_call_operand.hbm [shape: f32[1,1024], index: 2, kind: input, shape index: {}]
  %s3 = inlined_call_operand.hbm [shape: f32[64,1024], index: 3, kind: output, shape index: {}]
  %s4 = sld [smem:[#allocation0]]
  $region34: #{tpu_custom_call.1} parent=0
    _
  %s6 = ssub.s32 1, %s4
  %s7 = scalar_select 0, %s6, %s4
  $region1: #{tpu_custom_call.1} parent=0
    #allocation2 [shape = 'u8[32768]{0}', space=vmem, size = 0x8000, scoped, tag = 'input window, operand 0, single buffered']
    #allocation3 [shape = 's32[1]{0}', space=sflag, size = 0x4, scoped, tag = 'scoped memory for tpu_custom_call.1']
    #allocation4 [shape = 's32[1]{0}', space=sflag, size = 0x4, scoped, tag = 'scoped memory for tpu_custom_call.1']
    #allocation5 [shape = 'u8[327680]{0}', space=vmem, size = 0x50000, scoped, tag = 'input window, operand 1, single buffered']
    #allocation6 [shape = 's32[1]{0}', space=sflag, size = 0x4, scoped, tag = 'scoped memory for tpu_custom_call.1']
    #allocation7 [shape = 'u8[4096]{0}', space=vmem, size = 0x1000, scoped, tag = 'input window, operand 2, single buffered']
    #allocation8 [shape = 'u8[262144]{0}', space=vmem, size = 0x40000, scoped, tag = 'output window, operand 0, single buffered']
    %8 = vsyncpa [#allocation3], 0
    %9 = vsyncpa [#allocation6], 0
    %10 = vsyncpa [#allocation4], 0
    // Predicated region
    $region2: #{tpu_custom_call.1} parent=1 // pred_check
      _
    $region3: #{tpu_custom_call.1} parent=1 // pred_check_branch
      %12 = sbr.rel (0) target = $region5
    $region4: #{tpu_custom_call.1} parent=1 // pred_region
      %s14 = ssub.s32 1024, 1024
      %15 = vsyncadd [#allocation3], %s14
      %s16 = sshll.u32 [#allocation2], 4
      %s17 = int_to_ptr.vmem [resolvable:$true] %s16
      %22 = dma.hbm_to_vmem [thread:$0]  %s0, 1024, %s17, [#allocation3], 128, 128, 8
    $region5: #{tpu_custom_call.1} parent=1 // pred_fallthru
      _
    // Predicated region
    $region6: #{tpu_custom_call.1} parent=1 // pred_check
      _
    $region7: #{tpu_custom_call.1} parent=1 // pred_check_branch
      %24 = sbr.rel (0) target = $region9
    $region8: #{tpu_custom_call.1} parent=1 // pred_region
      %s26 = ssub.s32 10240, 10240
      %27 = vsyncadd [#allocation6], %s26
      %s28 = sshll.u32 [#allocation5], 4
      %s29 = int_to_ptr.vmem [resolvable:$true] %s28
      %34 = dma.hbm_to_vmem [thread:$0]  %s1, 10240, %s29, [#allocation6], 512, 512, 32
    $region9: #{tpu_custom_call.1} parent=1 // pred_fallthru
      _
    // Predicated region
    $region10: #{tpu_custom_call.1} parent=1 // pred_check
      _
    $region11: #{tpu_custom_call.1} parent=1 // pred_check_branch
      %36 = sbr.rel (0) target = $region13
    $region12: #{tpu_custom_call.1} parent=1 // pred_region
      %s38 = ssub.s32 128, 128
      %39 = vsyncadd [#allocation6], %s38
      %s41 = sshll.u32 [#allocation7], 4
      %s42 = int_to_ptr.vmem [resolvable:$true] %s41
      %44 = dma.hbm_to_vmem [thread:$0]  %s2, 128, %s42, [#allocation6]
    $region13: #{tpu_custom_call.1} parent=1 // pred_fallthru
      _
    // Predicated region
    $region14: #{tpu_custom_call.1} parent=1 // pred_check
      _
    $region15: #{tpu_custom_call.1} parent=1 // pred_check_branch
      %46 = sbr.rel (0) target = $region17
    $region16: #{tpu_custom_call.1} parent=1 // pred_region
      %47 = dma.done [#allocation3], 1024
    $region17: #{tpu_custom_call.1} parent=1 // pred_fallthru
      _
    // Predicated region
    $region18: #{tpu_custom_call.1} parent=1 // pred_check
      _
    $region19: #{tpu_custom_call.1} parent=1 // pred_check_branch
      %49 = sbr.rel (0) target = $region21
    $region20: #{tpu_custom_call.1} parent=1 // pred_region
      %50 = dma.done [#allocation6], 10240
    $region21: #{tpu_custom_call.1} parent=1 // pred_fallthru
      _
    // Predicated region
    $region22: #{tpu_custom_call.1} parent=1 // pred_check
      _
    $region23: #{tpu_custom_call.1} parent=1 // pred_check_branch
      %52 = sbr.rel (0) target = $region25
    $region24: #{tpu_custom_call.1} parent=1 // pred_region
      %53 = dma.done [#allocation6], 128
    $region25: #{tpu_custom_call.1} parent=1 // pred_fallthru
      _
    %v55 = vld [vmem:[#allocation2] sm:$0xff]
    %v56 = vld [vmem:[#allocation2 + $0x8] sm:$0xff]
    %v57 = vld [vmem:[#allocation2 + $0x10] sm:$0xff]
    %v58 = vld [vmem:[#allocation2 + $0x18] sm:$0xff]
    %v59 = vld [vmem:[#allocation2 + $0x20] sm:$0xff]
    %v60 = vld [vmem:[#allocation2 + $0x28] sm:$0xff]
    %v61 = vld [vmem:[#allocation2 + $0x30] sm:$0xff]
    %v62 = vld [vmem:[#allocation2 + $0x38] sm:$0xff]
    %v63 = vld [vmem:[#allocation5] sm:$0xff]
    %v64 = vld [vmem:[#allocation5 + $0x8] sm:$0xff]
    %v65 = vld [vmem:[#allocation5 + $0x10] sm:$0xff]
    %v66 = vld [vmem:[#allocation5 + $0x18] sm:$0xff]
    %v67 = vld [vmem:[#allocation5 + $0x20] sm:$0xff]
    %v68 = vld [vmem:[#allocation5 + $0x28] sm:$0xff]
    %v69 = vld [vmem:[#allocation5 + $0x30] sm:$0xff]
    %v70 = vld [vmem:[#allocation5 + $0x38] sm:$0xff]
    %v71 = vld [vmem:[#allocation5 + $0x40] sm:$0xff]
    %v72 = vld [vmem:[#allocation5 + $0x48] sm:$0xff]
    %v73 = vld [vmem:[#allocation5 + $0x50] sm:$0xff]
    %v74 = vld [vmem:[#allocation5 + $0x58] sm:$0xff]
    %v75 = vld [vmem:[#allocation5 + $0x60] sm:$0xff]
    %v76 = vld [vmem:[#allocation5 + $0x68] sm:$0xff]
    %v77 = vld [vmem:[#allocation5 + $0x70] sm:$0xff]
    %v78 = vld [vmem:[#allocation5 + $0x78] sm:$0xff]
    %v79 = vld [vmem:[#allocation5 + $0x80] sm:$0xff]
    %v80 = vld [vmem:[#allocation5 + $0x88] sm:$0xff]
    %v81 = vld [vmem:[#allocation5 + $0x90] sm:$0xff]
    %v82 = vld [vmem:[#allocation5 + $0x98] sm:$0xff]
    %v83 = vld [vmem:[#allocation5 + $0xa0] sm:$0xff]
    %v84 = vld [vmem:[#allocation5 + $0xa8] sm:$0xff]
    %v85 = vld [vmem:[#allocation5 + $0xb0] sm:$0xff]
    %v86 = vld [vmem:[#allocation5 + $0xb8] sm:$0xff]
    %v87 = vld [vmem:[#allocation5 + $0xc0] sm:$0xff]
    %v88 = vld [vmem:[#allocation5 + $0xc8] sm:$0xff]
    %v89 = vld [vmem:[#allocation5 + $0xd0] sm:$0xff]
    %v90 = vld [vmem:[#allocation5 + $0xd8] sm:$0xff]
    %v91 = vld [vmem:[#allocation5 + $0xe0] sm:$0xff]
    %v92 = vld [vmem:[#allocation5 + $0xe8] sm:$0xff]
    %v93 = vld [vmem:[#allocation5 + $0xf0] sm:$0xff]
    %v94 = vld [vmem:[#allocation5 + $0xf8] sm:$0xff]
    %v95 = vld [vmem:[#allocation5 + $0x100] sm:$0xff]
    %v96 = vld [vmem:[#allocation5 + $0x108] sm:$0xff]
    %v97 = vld [vmem:[#allocation5 + $0x110] sm:$0xff]
    %v98 = vld [vmem:[#allocation5 + $0x118] sm:$0xff]
    %v99 = vld [vmem:[#allocation5 + $0x120] sm:$0xff]
    %v100 = vld [vmem:[#allocation5 + $0x128] sm:$0xff]
    %v101 = vld [vmem:[#allocation5 + $0x130] sm:$0xff]
    %v102 = vld [vmem:[#allocation5 + $0x138] sm:$0xff]
    %v103 = vld [vmem:[#allocation5 + $0x140] sm:$0xff]
    %v104 = vld [vmem:[#allocation5 + $0x148] sm:$0xff]
    %v105 = vld [vmem:[#allocation5 + $0x150] sm:$0xff]
    %v106 = vld [vmem:[#allocation5 + $0x158] sm:$0xff]
    %v107 = vld [vmem:[#allocation5 + $0x160] sm:$0xff]
    %v108 = vld [vmem:[#allocation5 + $0x168] sm:$0xff]
    %v109 = vld [vmem:[#allocation5 + $0x170] sm:$0xff]
    %v110 = vld [vmem:[#allocation5 + $0x178] sm:$0xff]
    %v111 = vld [vmem:[#allocation5 + $0x180] sm:$0xff]
    %v112 = vld [vmem:[#allocation5 + $0x188] sm:$0xff]
    %v113 = vld [vmem:[#allocation5 + $0x190] sm:$0xff]
    %v114 = vld [vmem:[#allocation5 + $0x198] sm:$0xff]
    %v115 = vld [vmem:[#allocation5 + $0x1a0] sm:$0xff]
    %v116 = vld [vmem:[#allocation5 + $0x1a8] sm:$0xff]
    %v117 = vld [vmem:[#allocation5 + $0x1b0] sm:$0xff]
    %v118 = vld [vmem:[#allocation5 + $0x1b8] sm:$0xff]
    %v119 = vld [vmem:[#allocation5 + $0x1c0] sm:$0xff]
    %v120 = vld [vmem:[#allocation5 + $0x1c8] sm:$0xff]
    %v121 = vld [vmem:[#allocation5 + $0x1d0] sm:$0xff]
    %v122 = vld [vmem:[#allocation5 + $0x1d8] sm:$0xff]
    %v123 = vld [vmem:[#allocation5 + $0x1e0] sm:$0xff]
    %v124 = vld [vmem:[#allocation5 + $0x1e8] sm:$0xff]
    %v125 = vld [vmem:[#allocation5 + $0x1f0] sm:$0xff]
    %v126 = vld [vmem:[#allocation5 + $0x1f8] sm:$0xff]
    %v127 = vld [vmem:[#allocation5 + $0x200] sm:$0xff]
    %v128 = vld [vmem:[#allocation5 + $0x208] sm:$0xff]
    %v129 = vld [vmem:[#allocation5 + $0x210] sm:$0xff]
    %v130 = vld [vmem:[#allocation5 + $0x218] sm:$0xff]
    %v131 = vld [vmem:[#allocation5 + $0x220] sm:$0xff]
    %v132 = vld [vmem:[#allocation5 + $0x228] sm:$0xff]
    %v133 = vld [vmem:[#allocation5 + $0x230] sm:$0xff]
    %v134 = vld [vmem:[#allocation5 + $0x238] sm:$0xff]
    %v135 = vld [vmem:[#allocation5 + $0x240] sm:$0xff]
    %v136 = vld [vmem:[#allocation5 + $0x248] sm:$0xff]
    %v137 = vld [vmem:[#allocation5 + $0x250] sm:$0xff]
    %v138 = vld [vmem:[#allocation5 + $0x258] sm:$0xff]
    %v139 = vld [vmem:[#allocation5 + $0x260] sm:$0xff]
    %v140 = vld [vmem:[#allocation5 + $0x268] sm:$0xff]
    %v141 = vld [vmem:[#allocation5 + $0x270] sm:$0xff]
    %v142 = vld [vmem:[#allocation5 + $0x278] sm:$0xff]
    %v143 = vld [vmem:[#allocation7] sm:$0xff]
    %v145 = vlaneseq
    %v146 = vshrl.u32 %v145, 7
    %v147 = vsub.s32 0, %v146
    %v148 = vrot.slane %v143, %v147
    %v149 = vlaneseq
    %v150 = vshrl.u32 %v149, 7
    %v151 = vsub.s32 1, %v150
    %v152 = vrot.slane %v143, %v151
    %v153 = vlaneseq
    %v154 = vshrl.u32 %v153, 7
    %v155 = vsub.s32 2, %v154
    %v156 = vrot.slane %v143, %v155
    %v157 = vlaneseq
    %v158 = vshrl.u32 %v157, 7
    %v159 = vsub.s32 3, %v158
    %v160 = vrot.slane %v143, %v159
    %v161 = vlaneseq
    %v162 = vshrl.u32 %v161, 7
    %v163 = vsub.s32 4, %v162
    %v164 = vrot.slane %v143, %v163
    %v165 = vlaneseq
    %v166 = vshrl.u32 %v165, 7
    %v167 = vsub.s32 5, %v166
    %v168 = vrot.slane %v143, %v167
    %v169 = vlaneseq
    %v170 = vshrl.u32 %v169, 7
    %v171 = vsub.s32 6, %v170
    %v172 = vrot.slane %v143, %v171
    %v173 = vlaneseq
    %v174 = vshrl.u32 %v173, 7
    %v175 = vsub.s32 7, %v174
    %v176 = vrot.slane %v143, %v175
    %v193 = vunpack.c.l.b16 %v55
    %v194 = vunpack.c.h.b16 %v55
    %v195 = vunpack.c.l.b16 %v56
    %v196 = vunpack.c.h.b16 %v56
    %v197 = vunpack.c.l.b16 %v57
    %v198 = vunpack.c.h.b16 %v57
    %v199 = vunpack.c.l.b16 %v58
    %v200 = vunpack.c.h.b16 %v58
    %v201 = vunpack.c.l.b16 %v59
    %v202 = vunpack.c.h.b16 %v59
    %v203 = vunpack.c.l.b16 %v60
    %v204 = vunpack.c.h.b16 %v60
    %v205 = vunpack.c.l.b16 %v61
    %v206 = vunpack.c.h.b16 %v61
    %v207 = vunpack.c.l.b16 %v62
    %v208 = vunpack.c.h.b16 %v62
    %v209 = vpack.c.b16 %v195, %v193
    %v210 = vpack.c.b16 %v196, %v194
    %v211 = vpack.c.b16 %v199, %v197
    %v212 = vpack.c.b16 %v200, %v198
    %v213 = vpack.c.b16 %v203, %v201
    %v214 = vpack.c.b16 %v204, %v202
    %v215 = vpack.c.b16 %v207, %v205
    %v216 = vpack.c.b16 %v208, %v206
    %v301 = vunpack.c.l.b16 %v63
    %v302 = vunpack.c.h.b16 %v63
    %v303 = vunpack.c.l.b16 %v64
    %v304 = vunpack.c.h.b16 %v64
    %v305 = vunpack.c.l.b16 %v65
    %v306 = vunpack.c.h.b16 %v65
    %v307 = vunpack.c.l.b16 %v66
    %v308 = vunpack.c.h.b16 %v66
    %v309 = vunpack.c.l.b16 %v67
    %v310 = vunpack.c.h.b16 %v67
    %v311 = vunpack.c.l.b16 %v68
    %v312 = vunpack.c.h.b16 %v68
    %v313 = vunpack.c.l.b16 %v69
    %v314 = vunpack.c.h.b16 %v69
    %v315 = vunpack.c.l.b16 %v70
    %v316 = vunpack.c.h.b16 %v70
    %v317 = vunpack.c.l.b16 %v71
    %v318 = vunpack.c.h.b16 %v71
    %v319 = vunpack.c.l.b16 %v72
    %v320 = vunpack.c.h.b16 %v72
    %v321 = vunpack.c.l.b16 %v73
    %v322 = vunpack.c.h.b16 %v73
    %v323 = vunpack.c.l.b16 %v74
    %v324 = vunpack.c.h.b16 %v74
    %v325 = vunpack.c.l.b16 %v75
    %v326 = vunpack.c.h.b16 %v75
    %v327 = vunpack.c.l.b16 %v76
    %v328 = vunpack.c.h.b16 %v76
    %v329 = vunpack.c.l.b16 %v77
    %v330 = vunpack.c.h.b16 %v77
    %v331 = vunpack.c.l.b16 %v78
    %v332 = vunpack.c.h.b16 %v78
    %v333 = vunpack.c.l.b16 %v79
    %v334 = vunpack.c.h.b16 %v79
    %v335 = vunpack.c.l.b16 %v80
    %v336 = vunpack.c.h.b16 %v80
    %v337 = vunpack.c.l.b16 %v81
    %v338 = vunpack.c.h.b16 %v81
    %v339 = vunpack.c.l.b16 %v82
    %v340 = vunpack.c.h.b16 %v82
    %v341 = vunpack.c.l.b16 %v83
    %v342 = vunpack.c.h.b16 %v83
    %v343 = vunpack.c.l.b16 %v84
    %v344 = vunpack.c.h.b16 %v84
    %v345 = vunpack.c.l.b16 %v85
    %v346 = vunpack.c.h.b16 %v85
    %v347 = vunpack.c.l.b16 %v86
    %v348 = vunpack.c.h.b16 %v86
    %v349 = vunpack.c.l.b16 %v87
    %v350 = vunpack.c.h.b16 %v87
    %v351 = vunpack.c.l.b16 %v88
    %v352 = vunpack.c.h.b16 %v88
    %v353 = vunpack.c.l.b16 %v89
    %v354 = vunpack.c.h.b16 %v89
    %v355 = vunpack.c.l.b16 %v90
    %v356 = vunpack.c.h.b16 %v90
    %v357 = vunpack.c.l.b16 %v91
    %v358 = vunpack.c.h.b16 %v91
    %v359 = vunpack.c.l.b16 %v92
    %v360 = vunpack.c.h.b16 %v92
    %v361 = vunpack.c.l.b16 %v93
    %v362 = vunpack.c.h.b16 %v93
    %v363 = vunpack.c.l.b16 %v94
    %v364 = vunpack.c.h.b16 %v94
    %v365 = vunpack.c.l.b16 %v95
    %v366 = vunpack.c.h.b16 %v95
    %v367 = vunpack.c.l.b16 %v96
    %v368 = vunpack.c.h.b16 %v96
    %v369 = vunpack.c.l.b16 %v97
    %v370 = vunpack.c.h.b16 %v97
    %v371 = vunpack.c.l.b16 %v98
    %v372 = vunpack.c.h.b16 %v98
    %v373 = vunpack.c.l.b16 %v99
    %v374 = vunpack.c.h.b16 %v99
    %v375 = vunpack.c.l.b16 %v100
    %v376 = vunpack.c.h.b16 %v100
    %v377 = vunpack.c.l.b16 %v101
    %v378 = vunpack.c.h.b16 %v101
    %v379 = vunpack.c.l.b16 %v102
    %v380 = vunpack.c.h.b16 %v102
    %v381 = vunpack.c.l.b16 %v103
    %v382 = vunpack.c.h.b16 %v103
    %v383 = vunpack.c.l.b16 %v104
    %v384 = vunpack.c.h.b16 %v104
    %v385 = vunpack.c.l.b16 %v105
    %v386 = vunpack.c.h.b16 %v105
    %v387 = vunpack.c.l.b16 %v106
    %v388 = vunpack.c.h.b16 %v106
    %v389 = vunpack.c.l.b16 %v107
    %v390 = vunpack.c.h.b16 %v107
    %v391 = vunpack.c.l.b16 %v108
    %v392 = vunpack.c.h.b16 %v108
    %v393 = vunpack.c.l.b16 %v109
    %v394 = vunpack.c.h.b16 %v109
    %v395 = vunpack.c.l.b16 %v110
    %v396 = vunpack.c.h.b16 %v110
    %v397 = vunpack.c.l.b16 %v111
    %v398 = vunpack.c.h.b16 %v111
    %v399 = vunpack.c.l.b16 %v112
    %v400 = vunpack.c.h.b16 %v112
    %v401 = vunpack.c.l.b16 %v113
    %v402 = vunpack.c.h.b16 %v113
    %v403 = vunpack.c.l.b16 %v114
    %v404 = vunpack.c.h.b16 %v114
    %v405 = vunpack.c.l.b16 %v115
    %v406 = vunpack.c.h.b16 %v115
    %v407 = vunpack.c.l.b16 %v116
    %v408 = vunpack.c.h.b16 %v116
    %v409 = vunpack.c.l.b16 %v117
    %v410 = vunpack.c.h.b16 %v117
    %v411 = vunpack.c.l.b16 %v118
    %v412 = vunpack.c.h.b16 %v118
    %v413 = vunpack.c.l.b16 %v119
    %v414 = vunpack.c.h.b16 %v119
    %v415 = vunpack.c.l.b16 %v120
    %v416 = vunpack.c.h.b16 %v120
    %v417 = vunpack.c.l.b16 %v121
    %v418 = vunpack.c.h.b16 %v121
    %v419 = vunpack.c.l.b16 %v122
    %v420 = vunpack.c.h.b16 %v122
    %v421 = vunpack.c.l.b16 %v123
    %v422 = vunpack.c.h.b16 %v123
    %v423 = vunpack.c.l.b16 %v124
    %v424 = vunpack.c.h.b16 %v124
    %v425 = vunpack.c.l.b16 %v125
    %v426 = vunpack.c.h.b16 %v125
    %v427 = vunpack.c.l.b16 %v126
    %v428 = vunpack.c.h.b16 %v126
    %v429 = vunpack.c.l.b16 %v127
    %v430 = vunpack.c.h.b16 %v127
    %v431 = vunpack.c.l.b16 %v128
    %v432 = vunpack.c.h.b16 %v128
    %v433 = vunpack.c.l.b16 %v129
    %v434 = vunpack.c.h.b16 %v129
    %v435 = vunpack.c.l.b16 %v130
    %v436 = vunpack.c.h.b16 %v130
    %v437 = vunpack.c.l.b16 %v131
    %v438 = vunpack.c.h.b16 %v131
    %v439 = vunpack.c.l.b16 %v132
    %v440 = vunpack.c.h.b16 %v132
    %v441 = vunpack.c.l.b16 %v133
    %v442 = vunpack.c.h.b16 %v133
    %v443 = vunpack.c.l.b16 %v134
    %v444 = vunpack.c.h.b16 %v134
    %v445 = vunpack.c.l.b16 %v135
    %v446 = vunpack.c.h.b16 %v135
    %v447 = vunpack.c.l.b16 %v136
    %v448 = vunpack.c.h.b16 %v136
    %v449 = vunpack.c.l.b16 %v137
    %v450 = vunpack.c.h.b16 %v137
    %v451 = vunpack.c.l.b16 %v138
    %v452 = vunpack.c.h.b16 %v138
    %v453 = vunpack.c.l.b16 %v139
    %v454 = vunpack.c.h.b16 %v139
    %v455 = vunpack.c.l.b16 %v140
    %v456 = vunpack.c.h.b16 %v140
    %v457 = vunpack.c.l.b16 %v141
    %v458 = vunpack.c.h.b16 %v141
    %v459 = vunpack.c.l.b16 %v142
    %v460 = vunpack.c.h.b16 %v142
    %v461 = vpack.c.b16 %v309, %v301
    %v462 = vpack.c.b16 %v310, %v302
    %v463 = vpack.c.b16 %v311, %v303
    %v464 = vpack.c.b16 %v312, %v304
    %v465 = vpack.c.b16 %v313, %v305
    %v466 = vpack.c.b16 %v314, %v306
    %v467 = vpack.c.b16 %v315, %v307
    %v468 = vpack.c.b16 %v316, %v308
    %v469 = vpack.c.b16 %v325, %v317
    %v470 = vpack.c.b16 %v326, %v318
    %v471 = vpack.c.b16 %v327, %v319
    %v472 = vpack.c.b16 %v328, %v320
    %v473 = vpack.c.b16 %v329, %v321
    %v474 = vpack.c.b16 %v330, %v322
    %v475 = vpack.c.b16 %v331, %v323
    %v476 = vpack.c.b16 %v332, %v324
    %v477 = vpack.c.b16 %v341, %v333
    %v478 = vpack.c.b16 %v342, %v334
    %v479 = vpack.c.b16 %v343, %v335
    %v480 = vpack.c.b16 %v344, %v336
    %v481 = vpack.c.b16 %v345, %v337
    %v482 = vpack.c.b16 %v346, %v338
    %v483 = vpack.c.b16 %v347, %v339
    %v484 = vpack.c.b16 %v348, %v340
    %v485 = vpack.c.b16 %v357, %v349
    %v486 = vpack.c.b16 %v358, %v350
    %v487 = vpack.c.b16 %v359, %v351
    %v488 = vpack.c.b16 %v360, %v352
    %v489 = vpack.c.b16 %v361, %v353
    %v490 = vpack.c.b16 %v362, %v354
    %v491 = vpack.c.b16 %v363, %v355
    %v492 = vpack.c.b16 %v364, %v356
    %v493 = vpack.c.b16 %v373, %v365
    %v494 = vpack.c.b16 %v374, %v366
    %v495 = vpack.c.b16 %v375, %v367
    %v496 = vpack.c.b16 %v376, %v368
    %v497 = vpack.c.b16 %v377, %v369
    %v498 = vpack.c.b16 %v378, %v370
    %v499 = vpack.c.b16 %v379, %v371
    %v500 = vpack.c.b16 %v380, %v372
    %v501 = vpack.c.b16 %v389, %v381
    %v502 = vpack.c.b16 %v390, %v382
    %v503 = vpack.c.b16 %v391, %v383
    %v504 = vpack.c.b16 %v392, %v384
    %v505 = vpack.c.b16 %v393, %v385
    %v506 = vpack.c.b16 %v394, %v386
    %v507 = vpack.c.b16 %v395, %v387
    %v508 = vpack.c.b16 %v396, %v388
    %v509 = vpack.c.b16 %v405, %v397
    %v510 = vpack.c.b16 %v406, %v398
    %v511 = vpack.c.b16 %v407, %v399
    %v512 = vpack.c.b16 %v408, %v400
    %v513 = vpack.c.b16 %v409, %v401
    %v514 = vpack.c.b16 %v410, %v402
    %v515 = vpack.c.b16 %v411, %v403
    %v516 = vpack.c.b16 %v412, %v404
    %v517 = vpack.c.b16 %v421, %v413
    %v518 = vpack.c.b16 %v422, %v414
    %v519 = vpack.c.b16 %v423, %v415
    %v520 = vpack.c.b16 %v424, %v416
    %v521 = vpack.c.b16 %v425, %v417
    %v522 = vpack.c.b16 %v426, %v418
    %v523 = vpack.c.b16 %v427, %v419
    %v524 = vpack.c.b16 %v428, %v420
    %v525 = vpack.c.b16 %v437, %v429
    %v526 = vpack.c.b16 %v438, %v430
    %v527 = vpack.c.b16 %v439, %v431
    %v528 = vpack.c.b16 %v440, %v432
    %v529 = vpack.c.b16 %v441, %v433
    %v530 = vpack.c.b16 %v442, %v434
    %v531 = vpack.c.b16 %v443, %v435
    %v532 = vpack.c.b16 %v444, %v436
    %v533 = vpack.c.b16 %v453, %v445
    %v534 = vpack.c.b16 %v454, %v446
    %v535 = vpack.c.b16 %v455, %v447
    %v536 = vpack.c.b16 %v456, %v448
    %v537 = vpack.c.b16 %v457, %v449
    %v538 = vpack.c.b16 %v458, %v450
    %v539 = vpack.c.b16 %v459, %v451
    %v540 = vpack.c.b16 %v460, %v452
    %vm621 = vcmask 261120
    %v623 = vsel %vm621, %v210, 0
    %v626 = vsel %vm621, %v212, 0
    %v629 = vsel %vm621, %v214, 0
    %v632 = vsel %vm621, %v216, 0
    %634 = vmatprep.subr.bf16.mxu0 %v518
    %635 = vmatpush1.bf16.msra.mxu0 %v517
    %636 = vmatprep.subr.bf16.mxu0 %v510
    %637 = vmatpush1.bf16.msra.mxu0 %v509
    %638 = vmatprep.subr.bf16.mxu0 %v502
    %639 = vmatpush1.bf16.msra.mxu0 %v501
    %640 = vmatprep.subr.bf16.mxu0 %v494
    %641 = vmatpush1.bf16.msra.mxu0 %v493
    %642 = vmatprep.subr.bf16.mxu0 %v486
    %643 = vmatpush1.bf16.msra.mxu0 %v485
    %644 = vmatprep.subr.bf16.mxu0 %v478
    %645 = vmatpush1.bf16.msra.mxu0 %v477
    %646 = vmatprep.subr.bf16.mxu0 %v470
    %647 = vmatpush1.bf16.msra.mxu0 %v469
    %648 = vmatprep.subr.bf16.mxu0 %v462
    %649 = vmatpush1.bf16.msra.mxu0 %v461
    %650 = vmatprep.subr.bf16.mxu0 0
    %651 = vmatpush2.bf16.msra.mxu0 0
    %652 = vmatprep.subr.bf16.mxu0 0
    %653 = vmatpush2.bf16.msra.mxu0 0
    %654 = vmatprep.subr.bf16.mxu0 0
    %655 = vmatpush2.bf16.msra.mxu0 0
    %656 = vmatprep.subr.bf16.mxu0 0
    %657 = vmatpush2.bf16.msra.mxu0 0
    %658 = vmatprep.subr.bf16.mxu0 0
    %659 = vmatpush2.bf16.msra.mxu0 0
    %660 = vmatprep.subr.bf16.mxu0 0
    %661 = vmatpush2.bf16.msra.mxu0 0
    %662 = vmatprep.subr.bf16.mxu0 %v534
    %663 = vmatpush2.bf16.msra.mxu0 %v533
    %664 = vmatprep.subr.bf16.mxu0 %v526
    %665 = vmatpush2.bf16.msra.mxu0 %v525
    %666 = vmatprep.mubr.bf16.mxu0 %v623
    %667 = vmatmul.mubr.bf16.gmra.mxu0 %v209
    %v668 = vpop.f32.mrf.mxu0
    %v669 = vadd.f32 %v148, %v668
    %v670 = vpop.f32.mrf.mxu0
    %v671 = vadd.f32 %v152, %v670
    %v672 = vpop.f32.mrf.mxu0
    %v673 = vadd.f32 %v148, %v672
    %v674 = vpop.f32.mrf.mxu0
    %v675 = vadd.f32 %v152, %v674
    %676 = vmatprep.mubr.bf16.mxu0 %v626
    %677 = vmatmul.mubr.bf16.gmra.mxu0 %v211
    %v678 = vpop.f32.mrf.mxu0
    %v679 = vadd.f32 %v148, %v678
    %v680 = vpop.f32.mrf.mxu0
    %v681 = vadd.f32 %v152, %v680
    %v682 = vpop.f32.mrf.mxu0
    %v683 = vadd.f32 %v148, %v682
    %v684 = vpop.f32.mrf.mxu0
    %v685 = vadd.f32 %v152, %v684
    %686 = vmatprep.mubr.bf16.mxu0 %v629
    %687 = vmatmul.mubr.bf16.gmra.mxu0 %v213
    %v688 = vpop.f32.mrf.mxu0
    %v689 = vadd.f32 %v148, %v688
    %v690 = vpop.f32.mrf.mxu0
    %v691 = vadd.f32 %v152, %v690
    %v692 = vpop.f32.mrf.mxu0
    %v693 = vadd.f32 %v148, %v692
    %v694 = vpop.f32.mrf.mxu0
    %v695 = vadd.f32 %v152, %v694
    %696 = vmatprep.mubr.bf16.mxu0 %v632
    %697 = vmatmul.mubr.bf16.gmra.mxu0 %v215
    %v698 = vpop.f32.mrf.mxu0
    %v699 = vadd.f32 %v148, %v698
    %v700 = vpop.f32.mrf.mxu0
    %v701 = vadd.f32 %v152, %v700
    %v702 = vpop.f32.mrf.mxu0
    %v703 = vadd.f32 %v148, %v702
    %v704 = vpop.f32.mrf.mxu0
    %v705 = vadd.f32 %v152, %v704
    %706 = vdwg.mxu0
    %707 = vmatprep.subr.bf16.mxu0 %v520
    %708 = vmatpush1.bf16.msra.mxu0 %v519
    %709 = vmatprep.subr.bf16.mxu0 %v512
    %710 = vmatpush1.bf16.msra.mxu0 %v511
    %711 = vmatprep.subr.bf16.mxu0 %v504
    %712 = vmatpush1.bf16.msra.mxu0 %v503
    %713 = vmatprep.subr.bf16.mxu0 %v496
    %714 = vmatpush1.bf16.msra.mxu0 %v495
    %715 = vmatprep.subr.bf16.mxu0 %v488
    %716 = vmatpush1.bf16.msra.mxu0 %v487
    %717 = vmatprep.subr.bf16.mxu0 %v480
    %718 = vmatpush1.bf16.msra.mxu0 %v479
    %719 = vmatprep.subr.bf16.mxu0 %v472
    %720 = vmatpush1.bf16.msra.mxu0 %v471
    %721 = vmatprep.subr.bf16.mxu0 %v464
    %722 = vmatpush1.bf16.msra.mxu0 %v463
    %723 = vmatprep.subr.bf16.mxu0 0
    %724 = vmatpush2.bf16.msra.mxu0 0
    %725 = vmatprep.subr.bf16.mxu0 0
    %726 = vmatpush2.bf16.msra.mxu0 0
    %727 = vmatprep.subr.bf16.mxu0 0
    %728 = vmatpush2.bf16.msra.mxu0 0
    %729 = vmatprep.subr.bf16.mxu0 0
    %730 = vmatpush2.bf16.msra.mxu0 0
    %731 = vmatprep.subr.bf16.mxu0 0
    %732 = vmatpush2.bf16.msra.mxu0 0
    %733 = vmatprep.subr.bf16.mxu0 0
    %734 = vmatpush2.bf16.msra.mxu0 0
    %735 = vmatprep.subr.bf16.mxu0 %v536
    %736 = vmatpush2.bf16.msra.mxu0 %v535
    %737 = vmatprep.subr.bf16.mxu0 %v528
    %738 = vmatpush2.bf16.msra.mxu0 %v527
    %739 = vmatprep.mubr.bf16.mxu0 %v623
    %740 = vmatmul.mubr.bf16.gmra.mxu0 %v209
    %v741 = vpop.f32.mrf.mxu0
    %v742 = vadd.f32 %v156, %v741
    %v743 = vpop.f32.mrf.mxu0
    %v744 = vadd.f32 %v160, %v743
    %v745 = vpop.f32.mrf.mxu0
    %v746 = vadd.f32 %v156, %v745
    %v747 = vpop.f32.mrf.mxu0
    %v748 = vadd.f32 %v160, %v747
    %749 = vmatprep.mubr.bf16.mxu0 %v626
    %750 = vmatmul.mubr.bf16.gmra.mxu0 %v211
    %v751 = vpop.f32.mrf.mxu0
    %v752 = vadd.f32 %v156, %v751
    %v753 = vpop.f32.mrf.mxu0
    %v754 = vadd.f32 %v160, %v753
    %v755 = vpop.f32.mrf.mxu0
    %v756 = vadd.f32 %v156, %v755
    %v757 = vpop.f32.mrf.mxu0
    %v758 = vadd.f32 %v160, %v757
    %759 = vmatprep.mubr.bf16.mxu0 %v629
    %760 = vmatmul.mubr.bf16.gmra.mxu0 %v213
    %v761 = vpop.f32.mrf.mxu0
    %v762 = vadd.f32 %v156, %v761
    %v763 = vpop.f32.mrf.mxu0
    %v764 = vadd.f32 %v160, %v763
    %v765 = vpop.f32.mrf.mxu0
    %v766 = vadd.f32 %v156, %v765
    %v767 = vpop.f32.mrf.mxu0
    %v768 = vadd.f32 %v160, %v767
    %769 = vmatprep.mubr.bf16.mxu0 %v632
    %770 = vmatmul.mubr.bf16.gmra.mxu0 %v215
    %v771 = vpop.f32.mrf.mxu0
    %v772 = vadd.f32 %v156, %v771
    %v773 = vpop.f32.mrf.mxu0
    %v774 = vadd.f32 %v160, %v773
    %v775 = vpop.f32.mrf.mxu0
    %v776 = vadd.f32 %v156, %v775
    %v777 = vpop.f32.mrf.mxu0
    %v778 = vadd.f32 %v160, %v777
    %779 = vdwg.mxu0
    %780 = vmatprep.subr.bf16.mxu0 %v522
    %781 = vmatpush1.bf16.msra.mxu0 %v521
    %782 = vmatprep.subr.bf16.mxu0 %v514
    %783 = vmatpush1.bf16.msra.mxu0 %v513
    %784 = vmatprep.subr.bf16.mxu0 %v506
    %785 = vmatpush1.bf16.msra.mxu0 %v505
    %786 = vmatprep.subr.bf16.mxu0 %v498
    %787 = vmatpush1.bf16.msra.mxu0 %v497
    %788 = vmatprep.subr.bf16.mxu0 %v490
    %789 = vmatpush1.bf16.msra.mxu0 %v489
    %790 = vmatprep.subr.bf16.mxu0 %v482
    %791 = vmatpush1.bf16.msra.mxu0 %v481
    %792 = vmatprep.subr.bf16.mxu0 %v474
    %793 = vmatpush1.bf16.msra.mxu0 %v473
    %794 = vmatprep.subr.bf16.mxu0 %v466
    %795 = vmatpush1.bf16.msra.mxu0 %v465
    %796 = vmatprep.subr.bf16.mxu0 0
    %797 = vmatpush2.bf16.msra.mxu0 0
    %798 = vmatprep.subr.bf16.mxu0 0
    %799 = vmatpush2.bf16.msra.mxu0 0
    %800 = vmatprep.subr.bf16.mxu0 0
    %801 = vmatpush2.bf16.msra.mxu0 0
    %802 = vmatprep.subr.bf16.mxu0 0
    %803 = vmatpush2.bf16.msra.mxu0 0
    %804 = vmatprep.subr.bf16.mxu0 0
    %805 = vmatpush2.bf16.msra.mxu0 0
    %806 = vmatprep.subr.bf16.mxu0 0
    %807 = vmatpush2.bf16.msra.mxu0 0
    %808 = vmatprep.subr.bf16.mxu0 %v538
    %809 = vmatpush2.bf16.msra.mxu0 %v537
    %810 = vmatprep.subr.bf16.mxu0 %v530
    %811 = vmatpush2.bf16.msra.mxu0 %v529
    %812 = vmatprep.mubr.bf16.mxu0 %v623
    %813 = vmatmul.mubr.bf16.gmra.mxu0 %v209
    %v814 = vpop.f32.mrf.mxu0
    %v815 = vadd.f32 %v164, %v814
    %v816 = vpop.f32.mrf.mxu0
    %v817 = vadd.f32 %v168, %v816
    %v818 = vpop.f32.mrf.mxu0
    %v819 = vadd.f32 %v164, %v818
    %v820 = vpop.f32.mrf.mxu0
    %v821 = vadd.f32 %v168, %v820
    %822 = vmatprep.mubr.bf16.mxu0 %v626
    %823 = vmatmul.mubr.bf16.gmra.mxu0 %v211
    %v824 = vpop.f32.mrf.mxu0
    %v825 = vadd.f32 %v164, %v824
    %v826 = vpop.f32.mrf.mxu0
    %v827 = vadd.f32 %v168, %v826
    %v828 = vpop.f32.mrf.mxu0
    %v829 = vadd.f32 %v164, %v828
    %v830 = vpop.f32.mrf.mxu0
    %v831 = vadd.f32 %v168, %v830
    %832 = vmatprep.mubr.bf16.mxu0 %v629
    %833 = vmatmul.mubr.bf16.gmra.mxu0 %v213
    %v834 = vpop.f32.mrf.mxu0
    %v835 = vadd.f32 %v164, %v834
    %v836 = vpop.f32.mrf.mxu0
    %v837 = vadd.f32 %v168, %v836
    %v838 = vpop.f32.mrf.mxu0
    %v839 = vadd.f32 %v164, %v838
    %v840 = vpop.f32.mrf.mxu0
    %v841 = vadd.f32 %v168, %v840
    %842 = vmatprep.mubr.bf16.mxu0 %v632
    %843 = vmatmul.mubr.bf16.gmra.mxu0 %v215
    %v844 = vpop.f32.mrf.mxu0
    %v845 = vadd.f32 %v164, %v844
    %v846 = vpop.f32.mrf.mxu0
    %v847 = vadd.f32 %v168, %v846
    %v848 = vpop.f32.mrf.mxu0
    %v849 = vadd.f32 %v164, %v848
    %v850 = vpop.f32.mrf.mxu0
    %v851 = vadd.f32 %v168, %v850
    %852 = vdwg.mxu0
    %853 = vmatprep.subr.bf16.mxu0 %v524
    %854 = vmatpush1.bf16.msra.mxu0 %v523
    %855 = vmatprep.subr.bf16.mxu0 %v516
    %856 = vmatpush1.bf16.msra.mxu0 %v515
    %857 = vmatprep.subr.bf16.mxu0 %v508
    %858 = vmatpush1.bf16.msra.mxu0 %v507
    %859 = vmatprep.subr.bf16.mxu0 %v500
    %860 = vmatpush1.bf16.msra.mxu0 %v499
    %861 = vmatprep.subr.bf16.mxu0 %v492
    %862 = vmatpush1.bf16.msra.mxu0 %v491
    %863 = vmatprep.subr.bf16.mxu0 %v484
    %864 = vmatpush1.bf16.msra.mxu0 %v483
    %865 = vmatprep.subr.bf16.mxu0 %v476
    %866 = vmatpush1.bf16.msra.mxu0 %v475
    %867 = vmatprep.subr.bf16.mxu0 %v468
    %868 = vmatpush1.bf16.msra.mxu0 %v467
    %869 = vmatprep.subr.bf16.mxu0 0
    %870 = vmatpush2.bf16.msra.mxu0 0
    %871 = vmatprep.subr.bf16.mxu0 0
    %872 = vmatpush2.bf16.msra.mxu0 0
    %873 = vmatprep.subr.bf16.mxu0 0
    %874 = vmatpush2.bf16.msra.mxu0 0
    %875 = vmatprep.subr.bf16.mxu0 0
    %876 = vmatpush2.bf16.msra.mxu0 0
    %877 = vmatprep.subr.bf16.mxu0 0
    %878 = vmatpush2.bf16.msra.mxu0 0
    %879 = vmatprep.subr.bf16.mxu0 0
    %880 = vmatpush2.bf16.msra.mxu0 0
    %881 = vmatprep.subr.bf16.mxu0 %v540
    %882 = vmatpush2.bf16.msra.mxu0 %v539
    %883 = vmatprep.subr.bf16.mxu0 %v532
    %884 = vmatpush2.bf16.msra.mxu0 %v531
    %885 = vmatprep.mubr.bf16.mxu0 %v623
    %886 = vmatmul.mubr.bf16.gmra.mxu0 %v209
    %v887 = vpop.f32.mrf.mxu0
    %v888 = vadd.f32 %v172, %v887
    %v889 = vpop.f32.mrf.mxu0
    %v890 = vadd.f32 %v176, %v889
    %v891 = vpop.f32.mrf.mxu0
    %v892 = vadd.f32 %v172, %v891
    %v893 = vpop.f32.mrf.mxu0
    %v894 = vadd.f32 %v176, %v893
    %895 = vmatprep.mubr.bf16.mxu0 %v626
    %896 = vmatmul.mubr.bf16.gmra.mxu0 %v211
    %v897 = vpop.f32.mrf.mxu0
    %v898 = vadd.f32 %v172, %v897
    %v899 = vpop.f32.mrf.mxu0
    %v900 = vadd.f32 %v176, %v899
    %v901 = vpop.f32.mrf.mxu0
    %v902 = vadd.f32 %v172, %v901
    %v903 = vpop.f32.mrf.mxu0
    %v904 = vadd.f32 %v176, %v903
    %905 = vmatprep.mubr.bf16.mxu0 %v629
    %906 = vmatmul.mubr.bf16.gmra.mxu0 %v213
    %v907 = vpop.f32.mrf.mxu0
    %v908 = vadd.f32 %v172, %v907
    %v909 = vpop.f32.mrf.mxu0
    %v910 = vadd.f32 %v176, %v909
    %v911 = vpop.f32.mrf.mxu0
    %v912 = vadd.f32 %v172, %v911
    %v913 = vpop.f32.mrf.mxu0
    %v914 = vadd.f32 %v176, %v913
    %915 = vmatprep.mubr.bf16.mxu0 %v632
    %916 = vmatmul.mubr.bf16.gmra.mxu0 %v215
    %v917 = vpop.f32.mrf.mxu0
    %v918 = vadd.f32 %v172, %v917
    %v919 = vpop.f32.mrf.mxu0
    %v920 = vadd.f32 %v176, %v919
    %v921 = vpop.f32.mrf.mxu0
    %v922 = vadd.f32 %v172, %v921
    %v923 = vpop.f32.mrf.mxu0
    %v924 = vadd.f32 %v176, %v923
    %925 = vdwg.mxu0
    %926 = vst [vmem:[#allocation8] sm:$0xff] %v669
    %927 = vst [vmem:[#allocation8 + $0x8] sm:$0xff] %v671
    %928 = vst [vmem:[#allocation8 + $0x10] sm:$0xff] %v742
    %929 = vst [vmem:[#allocation8 + $0x18] sm:$0xff] %v744
    %930 = vst [vmem:[#allocation8 + $0x20] sm:$0xff] %v815
    %931 = vst [vmem:[#allocation8 + $0x28] sm:$0xff] %v817
    %932 = vst [vmem:[#allocation8 + $0x30] sm:$0xff] %v888
    %933 = vst [vmem:[#allocation8 + $0x38] sm:$0xff] %v890
    %934 = vst [vmem:[#allocation8 + $0x40] sm:$0xff] %v673
    %935 = vst [vmem:[#allocation8 + $0x48] sm:$0xff] %v675
    %936 = vst [vmem:[#allocation8 + $0x50] sm:$0xff] %v746
    %937 = vst [vmem:[#allocation8 + $0x58] sm:$0xff] %v748
    %938 = vst [vmem:[#allocation8 + $0x60] sm:$0xff] %v819
    %939 = vst [vmem:[#allocation8 + $0x68] sm:$0xff] %v821
    %940 = vst [vmem:[#allocation8 + $0x70] sm:$0xff] %v892
    %941 = vst [vmem:[#allocation8 + $0x78] sm:$0xff] %v894
    %942 = vst [vmem:[#allocation8 + $0x80] sm:$0xff] %v679
    %943 = vst [vmem:[#allocation8 + $0x88] sm:$0xff] %v681
    %944 = vst [vmem:[#allocation8 + $0x90] sm:$0xff] %v752
    %945 = vst [vmem:[#allocation8 + $0x98] sm:$0xff] %v754
    %946 = vst [vmem:[#allocation8 + $0xa0] sm:$0xff] %v825
    %947 = vst [vmem:[#allocation8 + $0xa8] sm:$0xff] %v827
    %948 = vst [vmem:[#allocation8 + $0xb0] sm:$0xff] %v898
    %949 = vst [vmem:[#allocation8 + $0xb8] sm:$0xff] %v900
    %950 = vst [vmem:[#allocation8 + $0xc0] sm:$0xff] %v683
    %951 = vst [vmem:[#allocation8 + $0xc8] sm:$0xff] %v685
    %952 = vst [vmem:[#allocation8 + $0xd0] sm:$0xff] %v756
    %953 = vst [vmem:[#allocation8 + $0xd8] sm:$0xff] %v758
    %954 = vst [vmem:[#allocation8 + $0xe0] sm:$0xff] %v829
    %955 = vst [vmem:[#allocation8 + $0xe8] sm:$0xff] %v831
    %956 = vst [vmem:[#allocation8 + $0xf0] sm:$0xff] %v902
    %957 = vst [vmem:[#allocation8 + $0xf8] sm:$0xff] %v904
    %958 = vst [vmem:[#allocation8 + $0x100] sm:$0xff] %v689
    %959 = vst [vmem:[#allocation8 + $0x108] sm:$0xff] %v691
    %960 = vst [vmem:[#allocation8 + $0x110] sm:$0xff] %v762
    %961 = vst [vmem:[#allocation8 + $0x118] sm:$0xff] %v764
    %962 = vst [vmem:[#allocation8 + $0x120] sm:$0xff] %v835
    %963 = vst [vmem:[#allocation8 + $0x128] sm:$0xff] %v837
    %964 = vst [vmem:[#allocation8 + $0x130] sm:$0xff] %v908
    %965 = vst [vmem:[#allocation8 + $0x138] sm:$0xff] %v910
    %966 = vst [vmem:[#allocation8 + $0x140] sm:$0xff] %v693
    %967 = vst [vmem:[#allocation8 + $0x148] sm:$0xff] %v695
    %968 = vst [vmem:[#allocation8 + $0x150] sm:$0xff] %v766
    %969 = vst [vmem:[#allocation8 + $0x158] sm:$0xff] %v768
    %970 = vst [vmem:[#allocation8 + $0x160] sm:$0xff] %v839
    %971 = vst [vmem:[#allocation8 + $0x168] sm:$0xff] %v841
    %972 = vst [vmem:[#allocation8 + $0x170] sm:$0xff] %v912
    %973 = vst [vmem:[#allocation8 + $0x178] sm:$0xff] %v914
    %974 = vst [vmem:[#allocation8 + $0x180] sm:$0xff] %v699
    %975 = vst [vmem:[#allocation8 + $0x188] sm:$0xff] %v701
    %976 = vst [vmem:[#allocation8 + $0x190] sm:$0xff] %v772
    %977 = vst [vmem:[#allocation8 + $0x198] sm:$0xff] %v774
    %978 = vst [vmem:[#allocation8 + $0x1a0] sm:$0xff] %v845
    %979 = vst [vmem:[#allocation8 + $0x1a8] sm:$0xff] %v847
    %980 = vst [vmem:[#allocation8 + $0x1b0] sm:$0xff] %v918
    %981 = vst [vmem:[#allocation8 + $0x1b8] sm:$0xff] %v920
    %982 = vst [vmem:[#allocation8 + $0x1c0] sm:$0xff] %v703
    %983 = vst [vmem:[#allocation8 + $0x1c8] sm:$0xff] %v705
    %984 = vst [vmem:[#allocation8 + $0x1d0] sm:$0xff] %v776
    %985 = vst [vmem:[#allocation8 + $0x1d8] sm:$0xff] %v778
    %986 = vst [vmem:[#allocation8 + $0x1e0] sm:$0xff] %v849
    %987 = vst [vmem:[#allocation8 + $0x1e8] sm:$0xff] %v851
    %988 = vst [vmem:[#allocation8 + $0x1f0] sm:$0xff] %v922
    %989 = vst [vmem:[#allocation8 + $0x1f8] sm:$0xff] %v924
    // Predicated region
    $region26: #{tpu_custom_call.1} parent=1 // pred_check
      _
    $region27: #{tpu_custom_call.1} parent=1 // pred_check_branch
      %991 = sbr.rel (0) target = $region29
    $region28: #{tpu_custom_call.1} parent=1 // pred_region
      %s993 = ssub.s32 8192, 8192
      %994 = vsyncadd [#allocation4], %s993
      %s995 = sshll.u32 [#allocation8], 4
      %s996 = int_to_ptr.vmem [resolvable:$true] %s995
      %1001 = dma.vmem_to_hbm [thread:$0]  %s996, 8192, %s3, [#allocation4], 1024, 1024, 64
    $region29: #{tpu_custom_call.1} parent=1 // pred_fallthru
      _
    // Predicated region
    $region30: #{tpu_custom_call.1} parent=1 // pred_check
      _
    $region31: #{tpu_custom_call.1} parent=1 // pred_check_branch
      %1003 = sbr.rel (0) target = $region33
    $region32: #{tpu_custom_call.1} parent=1 // pred_region
      %1004 = dma.done [#allocation4], 8192
    $region33: #{tpu_custom_call.1} parent=1 // pred_fallthru
      _
    %1005 = vsyncpa [#allocation3], 1
    %1006 = vsyncpa [#allocation6], 1
    %1007 = vsyncpa [#allocation4], 1

</llo_original>
